<compile_context>
chip_gen: v5e
topology: v5e:2x2
jax: 0.10.0
libtpu: 0.0.40
codegen_flags: <defaults>
</compile_context>

<pallas_src>
import jax
import jax.numpy as jnp
from jax.experimental import pallas as pl
from jax.experimental.pallas import tpu as pltpu

HIDDEN = 128
LANE = 128
SUBLANE = 8
_NEG_BIG = -1e30                    # finite "-inf" for padded logit lanes
VMEM_LIMIT_BYTES = 48 * 1024 * 1024  # explicit scoped-VMEM budget for grid path


def _round_up(n, m):
    return (n + m - 1) // m * m


def actor_kernel(x_ref, w1_ref, b1_ref, w2_ref, b2_ref, out_ref):
    x = x_ref[...]                                   # (B, S) f32
    s_dim = x.shape[-1]
    a_out = out_ref.shape[-1]                        # true action_dim (narrow store)
    mxu_dtype = w2_ref.dtype                         # bf16 (default) or f32

    # ---- Layer 1: tiny-K (S) contraction on the VPU: S unrolled FMAs over
    #      (B, 128) slabs; bias add + ReLU fused.  (Per review, this could move
    #      onto the otherwise-idle MXU in the compute-bound large-block regime;
    #      left on the VPU pending bundle profiling.)
    h = b1_ref[...]                                  # (1, H) -> broadcasts to (B, H)
    for k in range(s_dim):                           # static unroll, S small & static
        h = h + x[:, k:k + 1] * w1_ref[k:k + 1, :]   # (B,1)*(1,H) FMA on VALU
    h = jnp.maximum(h, 0.0)                          # fused ReLU

    # ---- Layer 2: K=128 -> MXU.  w2 is pre-cast in the wrapper; only the
    #      activations are cast here.  f32 accumulation, f32 bias add.
    logits = jnp.dot(h.astype(mxu_dtype), w2_ref[...],
                     preferred_element_type=jnp.float32) + b2_ref[...]

    # ---- Stable softmax along the lane-padded last dim.  Padded lanes carry
    #      zero weights + bias -1e30 -> exp underflows to exactly 0, so they do
    #      not perturb the denominator.  Exact reciprocal: the probabilities
    #      feed TRPO log-ratio / KL math downstream.
    m = jnp.max(logits, axis=-1, keepdims=True)
    e = jnp.exp(logits - m)
    denom = jnp.sum(e, axis=-1, keepdims=True)
    probs = e / denom
    out_ref[...] = probs[:, :a_out]                  # narrow (B, A) store


def prepare_actor_params(w1, b1, w2, b2, *, use_bf16_matmul=True):
    """One-time weight padding / casting, hoisted out of the per-call hot path."""
    S, H = w1.shape
    assert w2.shape[0] == H
    A = w2.shape[1]
    A_pad = max(LANE, pl.cdiv(A, LANE) * LANE)
    # Zero weights + very negative bias in padded lanes -> softmax prob exactly 0.
    w2p = jnp.zeros((H, A_pad), jnp.float32).at[:, :A].set(w2.astype(jnp.float32))
    b2p = jnp.full((1, A_pad), _NEG_BIG, jnp.float32).at[:, :A].set(
        b2.reshape(1, A).astype(jnp.float32))
    mxu_dtype = jnp.bfloat16 if use_bf16_matmul else jnp.float32
    return {
        "w1": w1.astype(jnp.float32),                 # stays f32 (VPU layer)
        "b1": b1.reshape(1, H).astype(jnp.float32),
        "w2": w2p.astype(mxu_dtype),                  # pre-cast once (not per step)
        "b2": b2p,                                    # f32, added post-accumulate
        "action_dim": A,
    }


def actor_forward(x, params, *, block_b=4096, small_batch_max=512):
    w1, b1, w2, b2 = params["w1"], params["b1"], params["w2"], params["b2"]
    A = params["action_dim"]
    B, S = x.shape
    H = w1.shape[1]
    A_pad = w2.shape[1]
    x = x.astype(jnp.float32)
    out_shape = jax.ShapeDtypeStruct((B, A), jnp.float32)

    if B <= small_batch_max:
        # Single-step / small-batch path: no grid (skips the software-pipeline
        # prologue/epilogue), whole arrays resident in VMEM.
        return pl.pallas_call(
            actor_kernel,
            out_shape=out_shape,
            in_specs=[pl.BlockSpec(memory_space=pltpu.MemorySpace.VMEM)] * 5,
            out_specs=pl.BlockSpec(memory_space=pltpu.MemorySpace.VMEM),
        )(x, w1, b1, w2, b2)

    # Rollout / training path: tile over the batch.  Guarantee >= 2 grid steps
    # so the "parallel" axis feeds both v7x TensorCores; block rows stay a
    # multiple of the sublane (8).  The ragged final block (if any) is handled
    # by Pallas: OOB input rows are garbage but row-independent, OOB output
    # rows are masked on writeback -- no padding copy of x.
    bb = min(block_b, _round_up(pl.cdiv(B, 2), SUBLANE))
    nb = pl.cdiv(B, bb)
    return pl.pallas_call(
        actor_kernel,
        out_shape=out_shape,
        grid=(nb,),
        in_specs=[
            pl.BlockSpec((bb, S), lambda i: (i, 0)),
            pl.BlockSpec((S, H), lambda i: (0, 0)),       # weights: constant maps,
            pl.BlockSpec((1, H), lambda i: (0, 0)),       # stay VMEM-resident
            pl.BlockSpec((H, A_pad), lambda i: (0, 0)),
            pl.BlockSpec((1, A_pad), lambda i: (0, 0)),
        ],
        out_specs=pl.BlockSpec((bb, A), lambda i: (i, 0)),  # narrow HBM writeback
        compiler_params=pltpu.CompilerParams(
            dimension_semantics=("parallel",),
            vmem_limit_bytes=VMEM_LIMIT_BYTES),
    )(x, w1, b1, w2, b2)


def init_actor_params(key, state_dim, action_dim, hidden=HIDDEN):
    # PyTorch nn.Linear default init: U(-1/sqrt(fan_in), 1/sqrt(fan_in)).
    k1, k2, k3, k4 = jax.random.split(key, 4)
    bound1 = 1.0 / jnp.sqrt(float(state_dim))
    bound2 = 1.0 / jnp.sqrt(float(hidden))
    w1 = jax.random.uniform(k1, (state_dim, hidden), jnp.float32, -bound1, bound1)
    b1 = jax.random.uniform(k2, (1, hidden), jnp.float32, -bound1, bound1)
    w2 = jax.random.uniform(k3, (hidden, action_dim), jnp.float32, -bound2, bound2)
    b2 = jax.random.uniform(k4, (1, action_dim), jnp.float32, -bound2, bound2)
    return w1, b1, w2, b2


if __name__ == "__main__":
    key = jax.random.PRNGKey(0)
    batch, state_dim, action_dim = 2, 4, 6

    k_params, k_x = jax.random.split(key)
    w1, b1, w2, b2 = init_actor_params(k_params, state_dim, action_dim)
    x = jax.random.normal(k_x, (batch, state_dim), jnp.float32)

    # Pure-JAX reference (same math as the PyTorch module).
    def ref_forward(xx):
        h = jnp.maximum(xx @ w1 + b1, 0.0)
        return jax.nn.softmax(h @ w2 + b2, axis=-1)

    probs_ref = ref_forward(x)

    # 1) Small-batch, no-grid path with f32 MXU operands (tight tolerance).
    params_f32 = prepare_actor_params(w1, b1, w2, b2, use_bf16_matmul=False)
    probs = actor_forward(x, params_f32)
    jax.block_until_ready(probs)
    assert probs.shape == (batch, action_dim)
    assert jnp.allclose(probs, probs_ref, atol=1e-5, rtol=1e-5)
    assert jnp.allclose(jnp.sum(probs, axis=-1), 1.0, atol=1e-5)

    # 2) Default bf16 MXU operands (all generations incl. v5e), looser tolerance.
    params = prepare_actor_params(w1, b1, w2, b2)
    probs_bf16 = actor_forward(x, params)
    jax.block_until_ready(probs_bf16)
    assert jnp.allclose(probs_bf16, probs_ref, atol=2e-2)

    # 3) Rollout path: batch-tiled grid (>= 2 parallel steps, ragged final
    #    block, VMEM-resident weights, narrow (B, A) output writeback).
    x_big = jax.random.normal(jax.random.PRNGKey(1), (600, state_dim), jnp.float32)
    ref_big = ref_forward(x_big)
    probs_big = actor_forward(x_big, params)
    jax.block_until_ready(probs_big)
    assert probs_big.shape == (600, action_dim)
    assert jnp.allclose(probs_big, ref_big, atol=2e-2)
    assert jnp.allclose(jnp.sum(probs_big, axis=-1), 1.0, atol=1e-3)

    # 4) Same rollout path with f32 MXU operands at tight tolerance.
    probs_big_f32 = actor_forward(x_big, params_f32)
    jax.block_until_ready(probs_big_f32)
    assert jnp.allclose(probs_big_f32, ref_big, atol=1e-5, rtol=1e-5)

    # TODO(synk): Actor.get_action (Categorical sample / .item() / log_prob /
    # entropy) is host-side control logic and is intentionally not a kernel.
    print("KERNEL_OK")
</pallas_src>

<mosaic_0001>
module attributes {stable_mosaic.version = 11 : i64} {
  func.func @actor_kernel(%arg0: memref<2x4xf32, #tpu.memory_space<vmem>>, %arg1: memref<4x128xf32, #tpu.memory_space<vmem>>, %arg2: memref<1x128xf32, #tpu.memory_space<vmem>>, %arg3: memref<128x128xf32, #tpu.memory_space<vmem>>, %arg4: memref<1x128xf32, #tpu.memory_space<vmem>>, %arg5: memref<2x6xf32, #tpu.memory_space<vmem>>) attributes {dimension_semantics = [], scalar_prefetch = 0 : i64, scratch_operands = 0 : i64, tpu.core_type = #tpu.core_type<tc>} {
    %c0 = arith.constant 0 : index
    %c0_0 = arith.constant 0 : index
    %0 = vector.load %arg0[%c0, %c0_0] : memref<2x4xf32, #tpu.memory_space<vmem>>, vector<2x4xf32>
    %c0_1 = arith.constant 0 : index
    %c0_2 = arith.constant 0 : index
    %1 = vector.load %arg2[%c0_1, %c0_2] : memref<1x128xf32, #tpu.memory_space<vmem>>, vector<1x128xf32>
    %2 = vector.extract_strided_slice %0 {offsets = [0, 0], sizes = [2, 1], strides = [1, 1]} : vector<2x4xf32> to vector<2x1xf32>
    %c0_3 = arith.constant 0 : index
    %c0_4 = arith.constant 0 : index
    %3 = vector.load %arg1[%c0_3, %c0_4] : memref<4x128xf32, #tpu.memory_space<vmem>>, vector<1x128xf32>
    %4 = vector.broadcast %2 : vector<2x1xf32> to vector<2x128xf32>
    %5 = vector.broadcast %3 : vector<1x128xf32> to vector<2x128xf32>
    %6 = arith.mulf %4, %5 : vector<2x128xf32>
    %7 = vector.broadcast %1 : vector<1x128xf32> to vector<2x128xf32>
    %8 = arith.addf %7, %6 : vector<2x128xf32>
    %9 = vector.extract_strided_slice %0 {offsets = [0, 1], sizes = [2, 1], strides = [1, 1]} : vector<2x4xf32> to vector<2x1xf32>
    %c1 = arith.constant 1 : index
    %c0_5 = arith.constant 0 : index
    %10 = vector.load %arg1[%c1, %c0_5] : memref<4x128xf32, #tpu.memory_space<vmem>>, vector<1x128xf32>
    %11 = vector.broadcast %9 : vector<2x1xf32> to vector<2x128xf32>
    %12 = vector.broadcast %10 : vector<1x128xf32> to vector<2x128xf32>
    %13 = arith.mulf %11, %12 : vector<2x128xf32>
    %14 = arith.addf %8, %13 : vector<2x128xf32>
    %15 = vector.extract_strided_slice %0 {offsets = [0, 2], sizes = [2, 1], strides = [1, 1]} : vector<2x4xf32> to vector<2x1xf32>
    %c2 = arith.constant 2 : index
    %c0_6 = arith.constant 0 : index
    %16 = vector.load %arg1[%c2, %c0_6] : memref<4x128xf32, #tpu.memory_space<vmem>>, vector<1x128xf32>
    %17 = vector.broadcast %15 : vector<2x1xf32> to vector<2x128xf32>
    %18 = vector.broadcast %16 : vector<1x128xf32> to vector<2x128xf32>
    %19 = arith.mulf %17, %18 : vector<2x128xf32>
    %20 = arith.addf %14, %19 : vector<2x128xf32>
    %21 = vector.extract_strided_slice %0 {offsets = [0, 3], sizes = [2, 1], strides = [1, 1]} : vector<2x4xf32> to vector<2x1xf32>
    %c3 = arith.constant 3 : index
    %c0_7 = arith.constant 0 : index
    %22 = vector.load %arg1[%c3, %c0_7] : memref<4x128xf32, #tpu.memory_space<vmem>>, vector<1x128xf32>
    %23 = vector.broadcast %21 : vector<2x1xf32> to vector<2x128xf32>
    %24 = vector.broadcast %22 : vector<1x128xf32> to vector<2x128xf32>
    %25 = arith.mulf %23, %24 : vector<2x128xf32>
    %26 = arith.addf %20, %25 : vector<2x128xf32>
    %cst = arith.constant 0.000000e+00 : f32
    %27 = vector.broadcast %cst : f32 to vector<2x128xf32>
    %28 = arith.maximumf %26, %27 : vector<2x128xf32>
    %c0_8 = arith.constant 0 : index
    %c0_9 = arith.constant 0 : index
    %29 = vector.load %arg3[%c0_8, %c0_9] : memref<128x128xf32, #tpu.memory_space<vmem>>, vector<128x128xf32>
    %cst_10 = arith.constant dense<0.000000e+00> : vector<2x128xf32>
    %30 = tpu.matmul %28, %29, %cst_10 {dimension_numbers = #tpu.dot_dimension_numbers<[1], [0], [0], [1], [0, 0, 1, 1], [], []>} : vector<2x128xf32>, vector<128x128xf32>, vector<2x128xf32> -> vector<2x128xf32>
    %c0_11 = arith.constant 0 : index
    %c0_12 = arith.constant 0 : index
    %31 = vector.load %arg4[%c0_11, %c0_12] : memref<1x128xf32, #tpu.memory_space<vmem>>, vector<1x128xf32>
    %32 = vector.broadcast %31 : vector<1x128xf32> to vector<2x128xf32>
    %33 = arith.addf %30, %32 : vector<2x128xf32>
    %cst_13 = arith.constant dense<0xFF800000> : vector<2xf32>
    %34 = vector.multi_reduction <maximumf>, %33, %cst_13 [1] : vector<2x128xf32> to vector<2xf32>
    %35 = vector.shape_cast %34 : vector<2xf32> to vector<2x1xf32>
    %36 = vector.broadcast %35 : vector<2x1xf32> to vector<2x128xf32>
    %37 = arith.subf %33, %36 : vector<2x128xf32>
    %38 = math.exp %37 : vector<2x128xf32>
    %cst_14 = arith.constant dense<0.000000e+00> : vector<2xf32>
    %39 = vector.multi_reduction <add>, %38, %cst_14 [1] : vector<2x128xf32> to vector<2xf32>
    %40 = vector.shape_cast %39 : vector<2xf32> to vector<2x1xf32>
    %41 = vector.broadcast %40 : vector<2x1xf32> to vector<2x128xf32>
    %42 = arith.divf %38, %41 : vector<2x128xf32>
    %43 = vector.extract_strided_slice %42 {offsets = [0, 0], sizes = [2, 6], strides = [1, 1]} : vector<2x128xf32> to vector<2x6xf32>
    %c0_15 = arith.constant 0 : index
    %c0_16 = arith.constant 0 : index
    %44 = vector.load %arg5[%c0_15, %c0_16] : memref<2x6xf32, #tpu.memory_space<vmem>>, vector<2x6xf32>
    tpu.vector_store %arg5[%c0_15, %c0_16], %43 {strides = array<i32>} : memref<2x6xf32, #tpu.memory_space<vmem>>, vector<2x6xf32>,
    return
  }
}

</mosaic_0001>

<llo_original>
// kernel: tpu_custom_call.1
$region0: #{tpu_custom_call.1}
  #allocation0 [shape = 'u32[]', space=smem, size = 0x4, offset = 0x4, fixed_abs, tag = 'smem constant byte address 0x4 - core index']
  #allocation1 [shape = 'u32[72,128]{1,0:T(1,128)}', space=vmem, size = 0x9000, scoped, tag = 'internal scratch']
  %s0 = inlined_call_operand.hbm [shape: f32[2,4], index: 0, kind: input, shape index: {}]
  %s1 = inlined_call_operand.hbm [shape: f32[4,128], index: 1, kind: input, shape index: {}]
  %s2 = inlined_call_operand.vmem [shape: f32[1,128], index: 2, kind: input, shape index: {}]
  %s3 = inlined_call_operand.hbm [shape: f32[128,128], index: 3, kind: input, shape index: {}]
  %s4 = inlined_call_operand.vmem [shape: f32[1,128], index: 4, kind: input, shape index: {}]
  %s5 = inlined_call_operand.hbm [shape: f32[2,6], index: 5, kind: output, shape index: {}]
  %s6 = sld [smem:[#allocation0]]
  $region42: #{tpu_custom_call.1} parent=0
    _
  %s8 = ssub.s32 1, %s6
  %s9 = scalar_select 0, %s8, %s6
  $region1: #{tpu_custom_call.1} parent=0
    #allocation2 [shape = 'u8[1024]{0}', space=vmem, size = 0x400, scoped, tag = 'input window, operand 0, single buffered']
    #allocation3 [shape = 's32[1]{0}', space=sflag, size = 0x4, scoped, tag = 'scoped memory for tpu_custom_call.1']
    #allocation4 [shape = 's32[1]{0}', space=sflag, size = 0x4, scoped, tag = 'scoped memory for tpu_custom_call.1']
    #allocation5 [shape = 'u8[2048]{0}', space=vmem, size = 0x800, scoped, tag = 'input window, operand 1, single buffered']
    #allocation6 [shape = 's32[1]{0}', space=sflag, size = 0x4, scoped, tag = 'scoped memory for tpu_custom_call.1']
    #allocation7 [shape = 'u8[65536]{0}', space=vmem, size = 0x10000, scoped, tag = 'input window, operand 3, single buffered']
    #allocation8 [shape = 'u8[1024]{0}', space=vmem, size = 0x400, scoped, tag = 'output window, operand 0, single buffered']
    %10 = vsyncpa [#allocation3], 0
    %11 = vsyncpa [#allocation6], 0
    %12 = vsyncpa [#allocation4], 0
    // Predicated region
    $region2: #{tpu_custom_call.1} parent=1 // pred_check
      _
    $region3: #{tpu_custom_call.1} parent=1 // pred_check_branch
      %14 = sbr.rel (0) target = $region5
    $region4: #{tpu_custom_call.1} parent=1 // pred_region
      %16 = vsyncadd [#allocation3], 0
      %s18 = sshll.u32 %s0, 4
      %s19 = int_to_ptr.hbm [resolvable:$true] %s18
      %s20 = sshll.u32 [#allocation2], 4
      %s21 = int_to_ptr.vmem [resolvable:$true] %s20
      %23 = dma.hbm_to_vmem [thread:$0]  %s19, 32, %s21, [#allocation3]
    $region5: #{tpu_custom_call.1} parent=1 // pred_fallthru
      _
    // Predicated region
    $region6: #{tpu_custom_call.1} parent=1 // pred_check
      _
    $region7: #{tpu_custom_call.1} parent=1 // pred_check_branch
      %25 = sbr.rel (0) target = $region9
    $region8: #{tpu_custom_call.1} parent=1 // pred_region
      %27 = vsyncadd [#allocation6], 0
      %s29 = sshll.u32 %s1, 4
      %s30 = int_to_ptr.hbm [resolvable:$true] %s29
      %s31 = sshll.u32 [#allocation5], 4
      %s32 = int_to_ptr.vmem [resolvable:$true] %s31
      %34 = dma.hbm_to_vmem [thread:$0]  %s30, 64, %s32, [#allocation6]
    $region9: #{tpu_custom_call.1} parent=1 // pred_fallthru
      _
    // Predicated region
    $region10: #{tpu_custom_call.1} parent=1 // pred_check
      _
    $region11: #{tpu_custom_call.1} parent=1 // pred_check_branch
      %36 = sbr.rel (0) target = $region13
    $region12: #{tpu_custom_call.1} parent=1 // pred_region
      _
    $region13: #{tpu_custom_call.1} parent=1 // pred_fallthru
      _
    // Predicated region
    $region14: #{tpu_custom_call.1} parent=1 // pred_check
      _
    $region15: #{tpu_custom_call.1} parent=1 // pred_check_branch
      %38 = sbr.rel (0) target = $region17
    $region16: #{tpu_custom_call.1} parent=1 // pred_region
      %40 = vsyncadd [#allocation6], 0
      %s41 = sshll.u32 %s3, 4
      %s42 = int_to_ptr.hbm [resolvable:$true] %s41
      %s43 = sshll.u32 [#allocation7], 4
      %s44 = int_to_ptr.vmem [resolvable:$true] %s43
      %49 = dma.hbm_to_vmem [thread:$0]  %s42, 2048, %s44, [#allocation6], 128, 128, 8
    $region17: #{tpu_custom_call.1} parent=1 // pred_fallthru
      _
    // Predicated region
    $region18: #{tpu_custom_call.1} parent=1 // pred_check
      _
    $region19: #{tpu_custom_call.1} parent=1 // pred_check_branch
      %51 = sbr.rel (0) target = $region21
    $region20: #{tpu_custom_call.1} parent=1 // pred_region
      _
    $region21: #{tpu_custom_call.1} parent=1 // pred_fallthru
      _
    // Predicated region
    $region22: #{tpu_custom_call.1} parent=1 // pred_check
      _
    $region23: #{tpu_custom_call.1} parent=1 // pred_check_branch
      %53 = sbr.rel (0) target = $region25
    $region24: #{tpu_custom_call.1} parent=1 // pred_region
      %55 = dma.done [#allocation3], 32
    $region25: #{tpu_custom_call.1} parent=1 // pred_fallthru
      _
    // Predicated region
    $region26: #{tpu_custom_call.1} parent=1 // pred_check
      _
    $region27: #{tpu_custom_call.1} parent=1 // pred_check_branch
      %57 = sbr.rel (0) target = $region29
    $region28: #{tpu_custom_call.1} parent=1 // pred_region
      %59 = dma.done [#allocation6], 64
    $region29: #{tpu_custom_call.1} parent=1 // pred_fallthru
      _
    // Predicated region
    $region30: #{tpu_custom_call.1} parent=1 // pred_check
      _
    $region31: #{tpu_custom_call.1} parent=1 // pred_check_branch
      %61 = sbr.rel (0) target = $region33
    $region32: #{tpu_custom_call.1} parent=1 // pred_region
      %63 = dma.done [#allocation6], 2048
    $region33: #{tpu_custom_call.1} parent=1 // pred_fallthru
      _
    %v64 = vld [vmem:[#allocation2] sm:$0x3]
    %v65 = vld [vmem:[%s2] sm:$0x1]
    %v66 = vld [vmem:[#allocation5] sm:$0x1]
    %68 = vset.pattern.permute.xlu0 0
    %69 = vperm.xlu0 %68, %v64
    %v70 = vpop.permute.xlu0 %69
    %v72 = vperm.slane %v66, 0
    %v73 = vmul.f32 %v70, %v72
    %v75 = vperm.slane %v65, 0
    %v77 = vadd.f32 %v75, %v73
    %v78 = vld [vmem:[#allocation5 + $0x1] sm:$0x1]
    %79 = vset.pattern.permute.xlu0 1
    %80 = vperm.xlu0 %79, %v64
    %v81 = vpop.permute.xlu0 %80
    %v83 = vperm.slane %v78, 0
    %v84 = vmul.f32 %v81, %v83
    %v85 = vadd.f32 %v77, %v84
    %v86 = vld [vmem:[#allocation5 + $0x2] sm:$0x1]
    %87 = vset.pattern.permute.xlu0 2
    %88 = vperm.xlu0 %87, %v64
    %v89 = vpop.permute.xlu0 %88
    %v91 = vperm.slane %v86, 0
    %v92 = vmul.f32 %v89, %v91
    %v93 = vadd.f32 %v85, %v92
    %v94 = vld [vmem:[#allocation5 + $0x3] sm:$0x1]
    %95 = vset.pattern.permute.xlu0 3
    %96 = vperm.xlu0 %95, %v64
    %v97 = vpop.permute.xlu0 %96
    %v99 = vperm.slane %v94, 0
    %v100 = vmul.f32 %v97, %v99
    %v101 = vadd.f32 %v93, %v100
    %v102 = vmax.f32 %v101, 0.0
    %v103 = vld [vmem:[#allocation7] sm:$0xff]
    %v104 = vld [vmem:[#allocation7 + $0x8] sm:$0xff]
    %v105 = vld [vmem:[#allocation7 + $0x10] sm:$0xff]
    %v106 = vld [vmem:[#allocation7 + $0x18] sm:$0xff]
    %v107 = vld [vmem:[#allocation7 + $0x20] sm:$0xff]
    %v108 = vld [vmem:[#allocation7 + $0x28] sm:$0xff]
    %v109 = vld [vmem:[#allocation7 + $0x30] sm:$0xff]
    %v110 = vld [vmem:[#allocation7 + $0x38] sm:$0xff]
    %v111 = vld [vmem:[#allocation7 + $0x40] sm:$0xff]
    %v112 = vld [vmem:[#allocation7 + $0x48] sm:$0xff]
    %v113 = vld [vmem:[#allocation7 + $0x50] sm:$0xff]
    %v114 = vld [vmem:[#allocation7 + $0x58] sm:$0xff]
    %v115 = vld [vmem:[#allocation7 + $0x60] sm:$0xff]
    %v116 = vld [vmem:[#allocation7 + $0x68] sm:$0xff]
    %v117 = vld [vmem:[#allocation7 + $0x70] sm:$0xff]
    %v118 = vld [vmem:[#allocation7 + $0x78] sm:$0xff]
    %v119 = vld [vmem:[%s4] sm:$0x1]
    %v121 = vperm.slane %v119, 0
    %123 = vmatpush.msra.mxu0 %v118
    %124 = vmatpush.msra.mxu0 %v117
    %125 = vmatpush.msra.mxu0 %v116
    %126 = vmatpush.msra.mxu0 %v115
    %127 = vmatpush.msra.mxu0 %v114
    %128 = vmatpush.msra.mxu0 %v113
    %129 = vmatpush.msra.mxu0 %v112
    %130 = vmatpush.msra.mxu0 %v111
    %131 = vmatpush.msra.mxu0 %v110
    %132 = vmatpush.msra.mxu0 %v109
    %133 = vmatpush.msra.mxu0 %v108
    %134 = vmatpush.msra.mxu0 %v107
    %135 = vmatpush.msra.mxu0 %v106
    %136 = vmatpush.msra.mxu0 %v105
    %137 = vmatpush.msra.mxu0 %v104
    %138 = vmatpush.msra.mxu0 %v103
    %139 = vmatmul.f32.gmra.mxu0 %v102
    %v140 = vpop.f32.mrf.mxu0
    %v141 = vadd.f32 %v121, %v140
    %142 = vdwg.mxu0
    %vm143 = vcmask 1041408
    %v144 = vsel %vm143, %v141, -inf
    %145 = vmax.xlane.f32.xlu0 %v144
    %v146 = vpop.xlane.xlu0 %145
    %v147 = vsub.f32 %v141, %v146
    %v148 = vmul.f32 %v147, 1.442695
    %v149 = vpow.pop %v148
    %v150 = vsel %vm143, %v149, 0.0
    %151 = vadd.xlane.f32.xlu0 %v150
    %v152 = vpop.xlane.xlu0 %151
    %v153 = vrcp.pop %v152
    %v154 = vmul.f32 %v152, %v153
    %v155 = vsub.f32 1.0, %v154
    %v156 = vmul.f32 %v153, %v155
    %v157 = vadd.f32 %v153, %v156
    %vm158 = vweird.f32 %v152
    %vm159 = vweird.f32 %v153
    %vm160 = vmor %vm158, %vm159
    %v161 = vsel %vm160, %v153, %v157
    %v162 = vand.u32 2147483647, %v152
    %vm163 = vcmp.eq.f32.partialorder %v162, 8.507059e+37
    %v164 = vand.u32 %v152, 2147483648
    %v165 = vor.u32 1.1754944e-38, %v164
    %v166 = vsel %vm163, %v165, %v161
    %v167 = vmul.f32 %v149, %v166
    %vm168 = vcmask 41984
    %169 = vst.msk [vmem:[#allocation8] sm:$0x3] %vm168, %v167
    // Predicated region
    $region34: #{tpu_custom_call.1} parent=1 // pred_check
      _
    $region35: #{tpu_custom_call.1} parent=1 // pred_check_branch
      %171 = sbr.rel (0) target = $region37
    $region36: #{tpu_custom_call.1} parent=1 // pred_region
      %173 = vsyncadd [#allocation4], 0
      %s175 = sshll.u32 [#allocation8], 4
      %s176 = int_to_ptr.vmem [resolvable:$true] %s175
      %s177 = sshll.u32 %s5, 4
      %s178 = int_to_ptr.hbm [resolvable:$true] %s177
      %180 = dma.vmem_to_hbm [thread:$0]  %s176, 32, %s178, [#allocation4]
    $region37: #{tpu_custom_call.1} parent=1 // pred_fallthru
      _
    // Predicated region
    $region38: #{tpu_custom_call.1} parent=1 // pred_check
      _
    $region39: #{tpu_custom_call.1} parent=1 // pred_check_branch
      %182 = sbr.rel (0) target = $region41
    $region40: #{tpu_custom_call.1} parent=1 // pred_region
      %184 = dma.done [#allocation4], 32
    $region41: #{tpu_custom_call.1} parent=1 // pred_fallthru
      _
    %185 = vsyncpa [#allocation3], 1
    %186 = vsyncpa [#allocation6], 1
    %187 = vsyncpa [#allocation4], 1

</llo_original>
